<compile_context>
chip_gen: v7x
topology: tpu7x:2x2x1
jax: 0.10.0
libtpu: 0.0.40
codegen_flags: <defaults>
</compile_context>

<pallas_src>
import functools

import jax
import jax.numpy as jnp
from jax.experimental import pallas as pl
from jax.experimental.pallas import tpu as pltpu

ACT = "tanh"  # cfg.model.activation_func  ('tanh' | 'sigm' | 'relu')

_LANE = 128      # vreg lane width -> lane-dense last dims, unmasked vst on output
_SUBLANE = 8     # f32 sublane height -> batch-tile granularity


def _round_up(n, m):
    return ((n + m - 1) // m) * m


def _device_kind():
    try:
        return jax.devices()[0].device_kind.lower()
    except Exception:
        return ""


def _has_bf16_vpu():
    # v6e / v7x have bf16 VPU + EUP paths; v5e (and older) do not.
    k = _device_kind()
    return ("v6" in k) or ("v7" in k)


def _mxu_n_align():
    # v6e/v7x MXU is 2x256x256 -> prefer 256-aligned N for large hidden dims;
    # v5e's 128x128 MXU is already fully occupied at 128.
    return 256 if _has_bf16_vpu() else _LANE


def _vmem_budget_bytes():
    # ~3/4 of physical VMEM: ~48 MiB on v7x (64 MiB), ~96 MiB on v5e/v6e (128 MiB).
    try:
        phys = int(pltpu.get_tpu_info().vmem_capacity_bytes)
    except Exception:
        phys = 64 * 1024 * 1024  # conservative fallback (safe on every generation)
    return (phys * 3) // 4


def _apply_act(x, act):
    if act == "tanh":
        return jnp.tanh(x)
    if act == "sigm":
        return jax.nn.sigmoid(x)
    if act == "relu":
        return jnp.maximum(x, 0.0)
    raise ValueError(act)


def mlp_kernel(x_ref, w1_ref, b1_ref, w2_ref, b2_ref, o_ref, *, act, epilogue_dtype):
    # Layer 1: cast the small (tm, D) x block to bf16 in VMEM (no HBM pad/cast pass);
    # MXU matmul with f32 accumulation.
    x = x_ref[...].astype(w1_ref.dtype)
    h = jnp.dot(x, w1_ref[...], preferred_element_type=jnp.float32)
    # Bias-add + activation epilogue: bf16 on v6e/v7x (bf16 VPU/EUP), f32 on v5e.
    h = _apply_act(h.astype(epilogue_dtype) + b1_ref[...], act)
    # Layer 2: when the epilogue is bf16, `h` is already the MXU operand dtype
    # (the astype below is then a no-op, no extra VPU cast pass).
    o = jnp.dot(h.astype(w2_ref.dtype), w2_ref[...], preferred_element_type=jnp.float32)
    o = _apply_act(o.astype(epilogue_dtype) + b2_ref[...], act)
    o_ref[...] = o.astype(o_ref.dtype)


def _invariant_spec(block_shape):
    # Weights/biases never change across grid steps -> single-buffer them so the
    # auto-pipeline does not double-buffer (halves their VMEM footprint).
    try:
        return pl.BlockSpec(block_shape, lambda i: (0, 0),
                            pipeline_mode=pl.Buffered(1))
    except Exception:
        return pl.BlockSpec(block_shape, lambda i: (0, 0))


def _pick_tm(B, D, Hp, x_itemsize, out_itemsize, budget):
    """Largest batch tile (multiple of 8, <= 1024 rows) that fits the VMEM budget."""
    # Count weights as double-buffered (conservative in case Buffered(1) is ignored).
    resident = 2 * ((D * Hp + Hp * Hp) * 2 + 2 * Hp * 4)
    tm = min(1024, _round_up(max(B, _SUBLANE), _SUBLANE))
    while tm > _SUBLANE:
        work = (resident
                + 2 * tm * D * x_itemsize      # x tiles, double-buffered
                + 2 * tm * Hp * out_itemsize   # out tiles, double-buffered
                + 4 * tm * Hp * 4)             # in-kernel temporaries (h, o, casts)
        if work <= budget:
            break
        tm = _round_up(max(tm // 2, _SUBLANE), _SUBLANE)
    return max(tm, _SUBLANE)


def prepare_mlp_params(w1, b1, w2, b2):
    """Pad (lane-align) and cast the Linear parameters ONCE, outside the hot path.

    w1: (D, H), b1: (H,) or (1, H), w2: (H, H), b2: (H,) or (1, H)
    (weights are in the pre-transposed `y = x @ W + b` layout of nn.Linear).

    Zero padding is semantics-preserving:
      * padded hidden lanes of layer-1 get act(0) (0.5 for sigmoid!) but w2's padded
        ROWS are zero, so they never leak into the real output columns;
      * padded output columns are sliced off by forward().
    """
    D, H = w1.shape
    assert w2.shape == (H, H)
    b1 = jnp.reshape(b1, (1, H))
    b2 = jnp.reshape(b2, (1, H))

    n_align = _LANE if H <= _LANE else _mxu_n_align()
    Hp = _round_up(H, n_align)
    epilogue_dtype = jnp.bfloat16 if _has_bf16_vpu() else jnp.float32

    # Fast path: skip the pad entirely when H is already aligned.
    pad_h = Hp - H
    w1p = (w1 if pad_h == 0 else jnp.pad(w1, ((0, 0), (0, pad_h)))).astype(jnp.bfloat16)
    w2p = (w2 if pad_h == 0 else jnp.pad(w2, ((0, pad_h), (0, pad_h)))).astype(jnp.bfloat16)
    b1p = (b1 if pad_h == 0 else jnp.pad(b1, ((0, 0), (0, pad_h)))).astype(epilogue_dtype)
    b2p = (b2 if pad_h == 0 else jnp.pad(b2, ((0, 0), (0, pad_h)))).astype(epilogue_dtype)

    return {"w1": w1p, "b1": b1p, "w2": w2p, "b2": b2p,
            "D": D, "H": H, "Hp": Hp, "epilogue_dtype": epilogue_dtype}


def basic_mlp_forward(x, params, *, act=ACT, tm=None, out_dtype=None):
    """x: (B, D); params from prepare_mlp_params. Returns (B, H)."""
    B, D = x.shape
    assert D == params["D"], "input feature dim mismatch"
    H, Hp = params["H"], params["Hp"]
    w1p, b1p, w2p, b2p = params["w1"], params["b1"], params["w2"], params["b2"]
    epilogue_dtype = params["epilogue_dtype"]
    if out_dtype is None:
        out_dtype = x.dtype

    budget = _vmem_budget_bytes()

    # Guard: resident weights must fit on-chip for the weight-resident kernel.
    resident_w = (D * Hp + Hp * Hp) * 2 + 2 * Hp * 4
    if 2 * resident_w > budget:
        # TODO(synk): implement an H-tiled grid (extra grid axis + pl.when-guarded f32
        # accumulator / pltpu.emit_pipeline over the hidden dim) for very large H;
        # fall back to plain XLA so huge configs still run correctly.
        h = _apply_act(jnp.dot(x, w1p.astype(jnp.float32)) + b1p.astype(jnp.float32), act)
        o = _apply_act(jnp.dot(h, w2p.astype(jnp.float32)) + b2p.astype(jnp.float32), act)
        return o[:, :H].astype(out_dtype)

    x_itemsize = jnp.dtype(x.dtype).itemsize
    out_itemsize = jnp.dtype(out_dtype).itemsize
    if tm is None:
        tm = _pick_tm(B, D, Hp, x_itemsize, out_itemsize, budget)
        # For batches that fit in <= 2 tiles, shrink tm so both grid steps carry real
        # rows (pipelining + v7x dual-TC sharding) instead of computing a garbage tile.
        tm = min(tm, max(_SUBLANE, _round_up(pl.cdiv(B, 2), _SUBLANE)))
    grid = (pl.cdiv(B, tm),)

    kernel = functools.partial(mlp_kernel, act=act, epilogue_dtype=epilogue_dtype)

    flops = 2 * B * (D * Hp + Hp * Hp)
    transcendentals = 2 * B * Hp if act in ("tanh", "sigm") else 0
    bytes_accessed = (B * D * x_itemsize
                      + w1p.size * 2 + w2p.size * 2
                      + (b1p.size + b2p.size) * jnp.dtype(epilogue_dtype).itemsize
                      + B * Hp * out_itemsize)

    out_padded = pl.pallas_call(
        kernel,
        out_shape=jax.ShapeDtypeStruct((B, Hp), out_dtype),
        grid_spec=pltpu.PrefetchScalarGridSpec(
            num_scalar_prefetch=0,
            grid=grid,
            in_specs=[
                pl.BlockSpec((tm, D), lambda i: (i, 0)),   # x tile over batch (unpadded D)
                _invariant_spec((D, Hp)),                  # w1 (resident)
                _invariant_spec((1, Hp)),                  # b1
                _invariant_spec((Hp, Hp)),                 # w2 (resident)
                _invariant_spec((1, Hp)),                  # b2
            ],
            out_specs=pl.BlockSpec((tm, Hp), lambda i: (i, 0)),
        ),
        compiler_params=pltpu.CompilerParams(
            dimension_semantics=("parallel",),
            vmem_limit_bytes=int(budget),
        ),
        cost_estimate=pl.CostEstimate(
            flops=flops,
            transcendentals=transcendentals,
            bytes_accessed=bytes_accessed,
        ),
    )(x, w1p, b1p, w2p, b2p)

    # Only the lane padding of the hidden dim needs slicing (rows are exact).
    return out_padded if Hp == H else out_padded[:, :H]


def _reference(x, w1, b1, w2, b2, act=ACT):
    h = _apply_act(x @ w1 + b1, act)
    return _apply_act(h @ w2 + b2, act)


if __name__ == "__main__":
    # Small shapes implied by the module: input_dim=16, hidden_dim=32, batch=8.
    B, D, H = 8, 16, 32
    key = jax.random.PRNGKey(0)
    kx, kw1, kb1, kw2, kb2 = jax.random.split(key, 5)

    x = jax.random.normal(kx, (B, D), dtype=jnp.float32)

    # Deterministic init mimicking nn.Linear's U(-1/sqrt(fan_in), 1/sqrt(fan_in)).
    lim1 = 1.0 / jnp.sqrt(jnp.float32(D))
    lim2 = 1.0 / jnp.sqrt(jnp.float32(H))
    w1 = jax.random.uniform(kw1, (D, H), jnp.float32, -lim1, lim1)
    b1 = jax.random.uniform(kb1, (H,), jnp.float32, -lim1, lim1)
    w2 = jax.random.uniform(kw2, (H, H), jnp.float32, -lim2, lim2)
    b2 = jax.random.uniform(kb2, (H,), jnp.float32, -lim2, lim2)

    # One-time weight preparation (pad + cast) outside the per-call hot path.
    params = prepare_mlp_params(w1, b1, w2, b2)

    out = basic_mlp_forward(x, params, act=ACT)
    out = jax.block_until_ready(out)

    ref = _reference(x, w1, b1.reshape(1, H), w2, b2.reshape(1, H), ACT)
    assert out.shape == (B, H)
    # bf16 MXU operands (+ bf16 epilogue on v6e/v7x) -> loose tolerance vs f32 ref.
    assert jnp.allclose(out, ref, atol=5e-2, rtol=5e-2), "mismatch vs reference"

    print("KERNEL_OK")
</pallas_src>

<mosaic_0001>
module attributes {stable_mosaic.version = 11 : i64} {
  func.func @mlp_kernel(%arg0: i32, %arg1: memref<8x16xf32, #tpu.memory_space<vmem>>, %arg2: memref<16x128xbf16, #tpu.memory_space<vmem>>, %arg3: memref<1x128xf32, #tpu.memory_space<vmem>>, %arg4: memref<128x128xbf16, #tpu.memory_space<vmem>>, %arg5: memref<1x128xf32, #tpu.memory_space<vmem>>, %arg6: memref<8x128xf32, #tpu.memory_space<vmem>>) attributes {dimension_semantics = [#tpu.dimension_semantics<parallel>], iteration_bounds = array<i64: 1>, scalar_prefetch = 0 : i64, scratch_operands = 0 : i64, tpu.core_type = #tpu.core_type<tc>, window_params = [{transform_indices = @transform_0, window_bounds = array<i64: 8, 16>}, {pipeline_mode = #tpu.pipeline_mode<synchronous>, transform_indices = @transform_1, window_bounds = array<i64: 16, 128>}, {pipeline_mode = #tpu.pipeline_mode<synchronous>, transform_indices = @transform_2, window_bounds = array<i64: 1, 128>}, {pipeline_mode = #tpu.pipeline_mode<synchronous>, transform_indices = @transform_3, window_bounds = array<i64: 128, 128>}, {pipeline_mode = #tpu.pipeline_mode<synchronous>, transform_indices = @transform_4, window_bounds = array<i64: 1, 128>}, {transform_indices = @transform_5, window_bounds = array<i64: 8, 128>}]} {
    %c0 = arith.constant 0 : index
    %c0_0 = arith.constant 0 : index
    %0 = vector.load %arg1[%c0, %c0_0] : memref<8x16xf32, #tpu.memory_space<vmem>>, vector<8x16xf32>
    %1 = arith.truncf %0 : vector<8x16xf32> to vector<8x16xbf16>
    %c0_1 = arith.constant 0 : index
    %c0_2 = arith.constant 0 : index
    %2 = vector.load %arg2[%c0_1, %c0_2] : memref<16x128xbf16, #tpu.memory_space<vmem>>, vector<16x128xbf16>
    %cst = arith.constant dense<0.000000e+00> : vector<8x128xf32>
    %3 = tpu.matmul %1, %2, %cst {dimension_numbers = #tpu.dot_dimension_numbers<[1], [0], [0], [1], [0, 0, 1, 1], [], []>} : vector<8x16xbf16>, vector<16x128xbf16>, vector<8x128xf32> -> vector<8x128xf32>
    %c0_3 = arith.constant 0 : index
    %c0_4 = arith.constant 0 : index
    %4 = vector.load %arg3[%c0_3, %c0_4] : memref<1x128xf32, #tpu.memory_space<vmem>>, vector<1x128xf32>
    %5 = vector.broadcast %4 : vector<1x128xf32> to vector<8x128xf32>
    %6 = arith.addf %3, %5 : vector<8x128xf32>
    %7 = math.tanh %6 : vector<8x128xf32>
    %8 = arith.truncf %7 : vector<8x128xf32> to vector<8x128xbf16>
    %c0_5 = arith.constant 0 : index
    %c0_6 = arith.constant 0 : index
    %9 = vector.load %arg4[%c0_5, %c0_6] : memref<128x128xbf16, #tpu.memory_space<vmem>>, vector<128x128xbf16>
    %cst_7 = arith.constant dense<0.000000e+00> : vector<8x128xf32>
    %10 = tpu.matmul %8, %9, %cst_7 {dimension_numbers = #tpu.dot_dimension_numbers<[1], [0], [0], [1], [0, 0, 1, 1], [], []>} : vector<8x128xbf16>, vector<128x128xbf16>, vector<8x128xf32> -> vector<8x128xf32>
    %c0_8 = arith.constant 0 : index
    %c0_9 = arith.constant 0 : index
    %11 = vector.load %arg5[%c0_8, %c0_9] : memref<1x128xf32, #tpu.memory_space<vmem>>, vector<1x128xf32>
    %12 = vector.broadcast %11 : vector<1x128xf32> to vector<8x128xf32>
    %13 = arith.addf %10, %12 : vector<8x128xf32>
    %14 = math.tanh %13 : vector<8x128xf32>
    %c0_10 = arith.constant 0 : index
    %c0_11 = arith.constant 0 : index
    %15 = vector.load %arg6[%c0_10, %c0_11] : memref<8x128xf32, #tpu.memory_space<vmem>>, vector<8x128xf32>
    tpu.vector_store %arg6[%c0_10, %c0_11], %14 {strides = array<i32>} : memref<8x128xf32, #tpu.memory_space<vmem>>, vector<8x128xf32>,
    return
  }
  func.func @transform_0(%arg0: i32) -> (i32, i32) {
    %c0_i32 = arith.constant 0 : i32
    %c0_i32_0 = arith.constant 0 : i32
    return %arg0, %c0_i32 : i32, i32
  }
  func.func @transform_1(%arg0: i32) -> (i32, i32) {
    %c0_i32 = arith.constant 0 : i32
    %c0_i32_0 = arith.constant 0 : i32
    %c0_i32_1 = arith.constant 0 : i32
    return %c0_i32, %c0_i32_0 : i32, i32
  }
  func.func @transform_2(%arg0: i32) -> (i32, i32) {
    %c0_i32 = arith.constant 0 : i32
    %c0_i32_0 = arith.constant 0 : i32
    %c0_i32_1 = arith.constant 0 : i32
    return %c0_i32, %c0_i32_0 : i32, i32
  }
  func.func @transform_3(%arg0: i32) -> (i32, i32) {
    %c0_i32 = arith.constant 0 : i32
    %c0_i32_0 = arith.constant 0 : i32
    %c0_i32_1 = arith.constant 0 : i32
    return %c0_i32, %c0_i32_0 : i32, i32
  }
  func.func @transform_4(%arg0: i32) -> (i32, i32) {
    %c0_i32 = arith.constant 0 : i32
    %c0_i32_0 = arith.constant 0 : i32
    %c0_i32_1 = arith.constant 0 : i32
    return %c0_i32, %c0_i32_0 : i32, i32
  }
  func.func @transform_5(%arg0: i32) -> (i32, i32) {
    %c0_i32 = arith.constant 0 : i32
    %c0_i32_0 = arith.constant 0 : i32
    return %arg0, %c0_i32 : i32, i32
  }
}

</mosaic_0001>

<llo_original>
// kernel: tpu_custom_call.1
$region0: #{tpu_custom_call.1}
  #allocation0 [shape = 'u32[]', space=smem, size = 0x4, offset = 0x4, fixed_abs, tag = 'smem constant byte address 0x4 - core index']
  #allocation1 [shape = 'u32[144,128]{1,0:T(1,128)}', space=vmem, size = 0x12000, scoped, tag = 'internal scratch']
  %s0 = inlined_call_operand.hbm [shape: f32[8,16], index: 0, kind: input, shape index: {}]
  %s1 = inlined_call_operand.hbm [shape: bf16[16,128], index: 1, kind: input, shape index: {}]
  %s2 = inlined_call_operand.vmem [shape: f32[1,128], index: 2, kind: input, shape index: {}]
  %s3 = inlined_call_operand.hbm [shape: bf16[128,128], index: 3, kind: input, shape index: {}]
  %s4 = inlined_call_operand.vmem [shape: f32[1,128], index: 4, kind: input, shape index: {}]
  %s5 = inlined_call_operand.hbm [shape: f32[8,128], index: 5, kind: output, shape index: {}]
  %s6 = sld [smem:[#allocation0]]
  $region42: #{tpu_custom_call.1} parent=0
    _
  %s8 = ssub.s32 1, %s6
  %s9 = scalar_select 0, %s8, %s6
  $region1: #{tpu_custom_call.1} parent=0
    #allocation2 [shape = 'u8[4096]{0}', space=vmem, size = 0x1000, scoped, tag = 'input window, operand 0, single buffered']
    #allocation3 [shape = 's32[1]{0}', space=sflag, size = 0x4, scoped, tag = 'scoped memory for tpu_custom_call.1']
    #allocation4 [shape = 's32[1]{0}', space=sflag, size = 0x4, scoped, tag = 'scoped memory for tpu_custom_call.1']
    #allocation5 [shape = 'u8[4096]{0}', space=vmem, size = 0x1000, scoped, tag = 'input window, operand 1, single buffered']
    #allocation6 [shape = 's32[1]{0}', space=sflag, size = 0x4, scoped, tag = 'scoped memory for tpu_custom_call.1']
    #allocation7 [shape = 'u8[32768]{0}', space=vmem, size = 0x8000, scoped, tag = 'input window, operand 3, single buffered']
    #allocation8 [shape = 'u8[4096]{0}', space=vmem, size = 0x1000, scoped, tag = 'output window, operand 0, single buffered']
    %10 = vsyncpa [#allocation3], 0
    %11 = vsyncpa [#allocation6], 0
    %12 = vsyncpa [#allocation4], 0
    // Predicated region
    $region2: #{tpu_custom_call.1} parent=1 // pred_check
      _
    $region3: #{tpu_custom_call.1} parent=1 // pred_check_branch
      %14 = sbr.rel (0) target = $region5
    $region4: #{tpu_custom_call.1} parent=1 // pred_region
      %s16 = ssub.s32 128, 128
      %17 = vsyncadd [#allocation3], %s16
      %s19 = sshll.u32 [#allocation2], 4
      %s20 = int_to_ptr.vmem [resolvable:$true] %s19
      %22 = dma.hbm_to_vmem [thread:$0]  %s0, 128, %s20, [#allocation3]
    $region5: #{tpu_custom_call.1} parent=1 // pred_fallthru
      _
    // Predicated region
    $region6: #{tpu_custom_call.1} parent=1 // pred_check
      _
    $region7: #{tpu_custom_call.1} parent=1 // pred_check_branch
      %24 = sbr.rel (0) target = $region9
    $region8: #{tpu_custom_call.1} parent=1 // pred_region
      %s26 = ssub.s32 128, 128
      %27 = vsyncadd [#allocation6], %s26
      %s28 = sshll.u32 [#allocation5], 4
      %s29 = int_to_ptr.vmem [resolvable:$true] %s28
      %34 = dma.hbm_to_vmem [thread:$0]  %s1, 128, %s29, [#allocation6], 64, 64, 4
    $region9: #{tpu_custom_call.1} parent=1 // pred_fallthru
      _
    // Predicated region
    $region10: #{tpu_custom_call.1} parent=1 // pred_check
      _
    $region11: #{tpu_custom_call.1} parent=1 // pred_check_branch
      %36 = sbr.rel (0) target = $region13
    $region12: #{tpu_custom_call.1} parent=1 // pred_region
      _
    $region13: #{tpu_custom_call.1} parent=1 // pred_fallthru
      _
    // Predicated region
    $region14: #{tpu_custom_call.1} parent=1 // pred_check
      _
    $region15: #{tpu_custom_call.1} parent=1 // pred_check_branch
      %38 = sbr.rel (0) target = $region17
    $region16: #{tpu_custom_call.1} parent=1 // pred_region
      %s40 = ssub.s32 1024, 1024
      %41 = vsyncadd [#allocation6], %s40
      %s42 = sshll.u32 [#allocation7], 4
      %s43 = int_to_ptr.vmem [resolvable:$true] %s42
      %48 = dma.hbm_to_vmem [thread:$0]  %s3, 1024, %s43, [#allocation6], 64, 64, 4
    $region17: #{tpu_custom_call.1} parent=1 // pred_fallthru
      _
    // Predicated region
    $region18: #{tpu_custom_call.1} parent=1 // pred_check
      _
    $region19: #{tpu_custom_call.1} parent=1 // pred_check_branch
      %50 = sbr.rel (0) target = $region21
    $region20: #{tpu_custom_call.1} parent=1 // pred_region
      _
    $region21: #{tpu_custom_call.1} parent=1 // pred_fallthru
      _
    // Predicated region
    $region22: #{tpu_custom_call.1} parent=1 // pred_check
      _
    $region23: #{tpu_custom_call.1} parent=1 // pred_check_branch
      %52 = sbr.rel (0) target = $region25
    $region24: #{tpu_custom_call.1} parent=1 // pred_region
      %53 = dma.done [#allocation3], 128
    $region25: #{tpu_custom_call.1} parent=1 // pred_fallthru
      _
    // Predicated region
    $region26: #{tpu_custom_call.1} parent=1 // pred_check
      _
    $region27: #{tpu_custom_call.1} parent=1 // pred_check_branch
      %55 = sbr.rel (0) target = $region29
    $region28: #{tpu_custom_call.1} parent=1 // pred_region
      %56 = dma.done [#allocation6], 128
    $region29: #{tpu_custom_call.1} parent=1 // pred_fallthru
      _
    // Predicated region
    $region30: #{tpu_custom_call.1} parent=1 // pred_check
      _
    $region31: #{tpu_custom_call.1} parent=1 // pred_check_branch
      %58 = sbr.rel (0) target = $region33
    $region32: #{tpu_custom_call.1} parent=1 // pred_region
      %59 = dma.done [#allocation6], 1024
    $region33: #{tpu_custom_call.1} parent=1 // pred_fallthru
      _
    %v61 = vld [vmem:[#allocation2] sm:$0xff]
    %v62 = vpack.c.bf16 %v61, %v61
    %v63 = vld [vmem:[#allocation5] sm:$0xf]
    %v64 = vld [vmem:[#allocation5 + $0x4] sm:$0xf]
    %v65 = vld [vmem:[%s2] sm:$0x1]
    %v67 = vlaneseq
    %v68 = vshrl.u32 %v67, 7
    %v69 = vsub.s32 0, %v68
    %v70 = vrot.slane %v65, %v69
    %v74 = vunpack.c.l.b16 %v63
    %v75 = vunpack.c.l.b16 %v64
    %v76 = vpack.c.b16 %v75, %v74
    %vm78 = vcmask 130048
    %v80 = vsel %vm78, %v62, 0
    %82 = vmatprep.subr.bf16.mxu0 0
    %83 = vmatpush1.bf16.msra.mxu0 %v76
    %84 = vmatprep.subr.bf16.mxu0 0
    %85 = vmatpush1.bf16.msra.mxu0 0
    %86 = vmatprep.subr.bf16.mxu0 0
    %87 = vmatpush1.bf16.msra.mxu0 0
    %88 = vmatprep.subr.bf16.mxu0 0
    %89 = vmatpush1.bf16.msra.mxu0 0
    %90 = vmatprep.subr.bf16.mxu0 0
    %91 = vmatpush1.bf16.msra.mxu0 0
    %92 = vmatprep.subr.bf16.mxu0 0
    %93 = vmatpush1.bf16.msra.mxu0 0
    %94 = vmatprep.subr.bf16.mxu0 0
    %95 = vmatpush1.bf16.msra.mxu0 0
    %96 = vmatprep.subr.bf16.mxu0 0
    %97 = vmatpush1.bf16.msra.mxu0 0
    %98 = vmatprep.subr.bf16.mxu0 0
    %99 = vmatpush1.bf16.msra.mxu0 0
    %100 = vmatprep.subr.bf16.mxu0 0
    %101 = vmatpush1.bf16.msra.mxu0 0
    %102 = vmatprep.subr.bf16.mxu0 0
    %103 = vmatpush1.bf16.msra.mxu0 0
    %104 = vmatprep.subr.bf16.mxu0 0
    %105 = vmatpush1.bf16.msra.mxu0 0
    %106 = vmatprep.subr.bf16.mxu0 0
    %107 = vmatpush1.bf16.msra.mxu0 0
    %108 = vmatprep.subr.bf16.mxu0 0
    %109 = vmatpush1.bf16.msra.mxu0 0
    %110 = vmatprep.subr.bf16.mxu0 0
    %111 = vmatpush1.bf16.msra.mxu0 0
    %112 = vmatprep.subr.bf16.mxu0 0
    %113 = vmatpush1.bf16.msra.mxu0 0
    %114 = vmatprep.mubr.bf16.mxu0 0
    %115 = vmatmul.mubr.bf16.gmra.mrb[0].mxu0 %v80
    %v116 = vpop.f32.mrb[0].mxu0
    %v117 = vadd.f32 %v70, %v116
    %v118 = vpop.f32.mrb[0].mxu0
    %v119 = vpop.f32.mrb[0].mxu0
    %v120 = vpop.f32.mrb[0].mxu0
    %121 = vdwg.mxu0
    %v122 = vtanh.pop %v117
    %v123 = vpack.c.bf16 %v122, %v122
    %v124 = vld [vmem:[#allocation7] sm:$0xf]
    %v125 = vld [vmem:[#allocation7 + $0x4] sm:$0xf]
    %v126 = vld [vmem:[#allocation7 + $0x8] sm:$0xf]
    %v127 = vld [vmem:[#allocation7 + $0xc] sm:$0xf]
    %v128 = vld [vmem:[#allocation7 + $0x10] sm:$0xf]
    %v129 = vld [vmem:[#allocation7 + $0x14] sm:$0xf]
    %v130 = vld [vmem:[#allocation7 + $0x18] sm:$0xf]
    %v131 = vld [vmem:[#allocation7 + $0x1c] sm:$0xf]
    %v132 = vld [vmem:[#allocation7 + $0x20] sm:$0xf]
    %v133 = vld [vmem:[#allocation7 + $0x24] sm:$0xf]
    %v134 = vld [vmem:[#allocation7 + $0x28] sm:$0xf]
    %v135 = vld [vmem:[#allocation7 + $0x2c] sm:$0xf]
    %v136 = vld [vmem:[#allocation7 + $0x30] sm:$0xf]
    %v137 = vld [vmem:[#allocation7 + $0x34] sm:$0xf]
    %v138 = vld [vmem:[#allocation7 + $0x38] sm:$0xf]
    %v139 = vld [vmem:[#allocation7 + $0x3c] sm:$0xf]
    %v140 = vld [vmem:[%s4] sm:$0x1]
    %v142 = vlaneseq
    %v143 = vshrl.u32 %v142, 7
    %v144 = vsub.s32 0, %v143
    %v145 = vrot.slane %v140, %v144
    %v163 = vunpack.c.l.b16 %v124
    %v164 = vunpack.c.l.b16 %v125
    %v165 = vunpack.c.l.b16 %v126
    %v166 = vunpack.c.l.b16 %v127
    %v167 = vunpack.c.l.b16 %v128
    %v168 = vunpack.c.l.b16 %v129
    %v169 = vunpack.c.l.b16 %v130
    %v170 = vunpack.c.l.b16 %v131
    %v171 = vunpack.c.l.b16 %v132
    %v172 = vunpack.c.l.b16 %v133
    %v173 = vunpack.c.l.b16 %v134
    %v174 = vunpack.c.l.b16 %v135
    %v175 = vunpack.c.l.b16 %v136
    %v176 = vunpack.c.l.b16 %v137
    %v177 = vunpack.c.l.b16 %v138
    %v178 = vunpack.c.l.b16 %v139
    %v179 = vpack.c.b16 %v164, %v163
    %v180 = vpack.c.b16 %v166, %v165
    %v181 = vpack.c.b16 %v168, %v167
    %v182 = vpack.c.b16 %v170, %v169
    %v183 = vpack.c.b16 %v172, %v171
    %v184 = vpack.c.b16 %v174, %v173
    %v185 = vpack.c.b16 %v176, %v175
    %v186 = vpack.c.b16 %v178, %v177
    %195 = vmatprep.subr.bf16.mxu0 0
    %196 = vmatpush1.bf16.msra.mxu0 %v179
    %197 = vmatprep.subr.bf16.mxu0 0
    %198 = vmatpush1.bf16.msra.mxu0 %v180
    %199 = vmatprep.subr.bf16.mxu0 0
    %200 = vmatpush1.bf16.msra.mxu0 %v181
    %201 = vmatprep.subr.bf16.mxu0 0
    %202 = vmatpush1.bf16.msra.mxu0 %v182
    %203 = vmatprep.subr.bf16.mxu0 0
    %204 = vmatpush1.bf16.msra.mxu0 %v183
    %205 = vmatprep.subr.bf16.mxu0 0
    %206 = vmatpush1.bf16.msra.mxu0 %v184
    %207 = vmatprep.subr.bf16.mxu0 0
    %208 = vmatpush1.bf16.msra.mxu0 %v185
    %209 = vmatprep.subr.bf16.mxu0 0
    %210 = vmatpush1.bf16.msra.mxu0 %v186
    %211 = vmatprep.subr.bf16.mxu0 0
    %212 = vmatpush1.bf16.msra.mxu0 0
    %213 = vmatprep.subr.bf16.mxu0 0
    %214 = vmatpush1.bf16.msra.mxu0 0
    %215 = vmatprep.subr.bf16.mxu0 0
    %216 = vmatpush1.bf16.msra.mxu0 0
    %217 = vmatprep.subr.bf16.mxu0 0
    %218 = vmatpush1.bf16.msra.mxu0 0
    %219 = vmatprep.subr.bf16.mxu0 0
    %220 = vmatpush1.bf16.msra.mxu0 0
    %221 = vmatprep.subr.bf16.mxu0 0
    %222 = vmatpush1.bf16.msra.mxu0 0
    %223 = vmatprep.subr.bf16.mxu0 0
    %224 = vmatpush1.bf16.msra.mxu0 0
    %225 = vmatprep.subr.bf16.mxu0 0
    %226 = vmatpush1.bf16.msra.mxu0 0
    %227 = vmatprep.mubr.bf16.mxu0 0
    %228 = vmatmul.mubr.bf16.gmra.mrb[0].mxu0 %v123
    %v229 = vpop.f32.mrb[0].mxu0
    %v230 = vadd.f32 %v145, %v229
    %v231 = vpop.f32.mrb[0].mxu0
    %v232 = vpop.f32.mrb[0].mxu0
    %v233 = vpop.f32.mrb[0].mxu0
    %234 = vdwg.mxu0
    %v235 = vtanh.pop %v230
    %236 = vst [vmem:[#allocation8] sm:$0xff] %v235
    // Predicated region
    $region34: #{tpu_custom_call.1} parent=1 // pred_check
      _
    $region35: #{tpu_custom_call.1} parent=1 // pred_check_branch
      %238 = sbr.rel (0) target = $region37
    $region36: #{tpu_custom_call.1} parent=1 // pred_region
      %s240 = ssub.s32 128, 128
      %241 = vsyncadd [#allocation4], %s240
      %s243 = sshll.u32 [#allocation8], 4
      %s244 = int_to_ptr.vmem [resolvable:$true] %s243
      %246 = dma.vmem_to_hbm [thread:$0]  %s244, 128, %s5, [#allocation4]
    $region37: #{tpu_custom_call.1} parent=1 // pred_fallthru
      _
    // Predicated region
    $region38: #{tpu_custom_call.1} parent=1 // pred_check
      _
    $region39: #{tpu_custom_call.1} parent=1 // pred_check_branch
      %248 = sbr.rel (0) target = $region41
    $region40: #{tpu_custom_call.1} parent=1 // pred_region
      %249 = dma.done [#allocation4], 128
    $region41: #{tpu_custom_call.1} parent=1 // pred_fallthru
      _
    %250 = vsyncpa [#allocation3], 1
    %251 = vsyncpa [#allocation6], 1
    %252 = vsyncpa [#allocation4], 1

</llo_original>
